<compile_context>
chip_gen: v5e
topology: v5e:2x2
jax: 0.10.0
libtpu: 0.0.40
codegen_flags: <defaults>
</compile_context>

<pallas_src>
import jax
import jax.numpy as jnp
from jax import lax
from jax.experimental import pallas as pl
from jax.experimental.pallas import tpu as pltpu

# --- toy problem sizes (consistent with the module's forward) ---
B = 2          # batch
S = 8          # full sequence length (first N_TOKENS columns are placeholders)
N_TOKENS = 4   # number of soft-prompt tokens
V = 64         # vocab size
D = 128        # embedding / hidden dim (lane-dense)


def _round_up(x, m):
    return (x + m - 1) // m * m


def soft_embedding_forward(tokens, wte_weight, learned_embedding, *, max_tile_rows=512):
    """tokens: [B, S] int; wte_weight: [V, D]; learned_embedding: [N, D] -> [B, S, D] f32."""
    b, s = tokens.shape
    v, d = wte_weight.shape
    n_tok, d2 = learned_embedding.shape
    assert d == d2 and s > n_tok
    bs = b * s

    # Fused lookup table: rows [0, n_tok) = learned soft prompt, rows
    # [n_tok, n_tok + v) = wte.  Pad K to a multiple of 128 so the single one-hot
    # contraction is MXU-native; padded rows are never selected (semantically inert).
    k_raw = n_tok + v
    k_pad = _round_up(k_raw, 128)
    table = jnp.concatenate(
        [learned_embedding.astype(jnp.float32),
         wte_weight.astype(jnp.float32),
         jnp.zeros((k_pad - k_raw, d), jnp.float32)], axis=0)          # [K, D]

    # Row tiling: tile_rows is a multiple of 8 (sublane) and at most max_tile_rows
    # (>=256 fills the v6e/v7x MXU and amortizes the ~0.35us/grid-step overhead).
    tile_rows = min(max_tile_rows, _round_up(bs, 8))
    bs_pad = _round_up(bs, tile_rows)
    grid = (bs_pad // tile_rows,)

    tok_col = tokens.reshape(bs, 1).astype(jnp.int32)
    if bs_pad != bs:
        tok_col = jnp.concatenate(
            [tok_col, jnp.zeros((bs_pad - bs, 1), jnp.int32)], axis=0)

    def kernel(tok_ref, table_ref, out_ref):
        # tok_ref   : [tile_rows, 1]  int32 (advances with grid)
        # table_ref : [K, D]          f32   (constant index_map -> resident)
        # out_ref   : [tile_rows, D]  f32
        t = tok_ref.shape[0]
        row = (pl.program_id(0) * t
               + lax.broadcasted_iota(jnp.int32, (t, 1), 0))     # flat output row
        pos = row % s                                            # sequence position
        is_prefix = pos < n_tok                                  # soft-prompt rows
        tok = jnp.clip(tok_ref[...], 0, v - 1)                   # OOB ids -> clamp
        # Fused-table row index: placeholder tokens on prefix rows are ignored,
        # matching tokens[:, n_tokens:] in the PyTorch forward.
        idx = jnp.where(is_prefix, pos, n_tok + tok)             # [t, 1]
        # Single one-hot [t, K] and ONE MXU dot; HIGHEST precision keeps the
        # f32 selection exact (this is a gather, not an approximate matmul).
        jk = lax.broadcasted_iota(jnp.int32, (t, k_pad), 1)
        oh = (jk == idx).astype(jnp.float32)
        out_ref[...] = jnp.dot(oh, table_ref[...],
                               preferred_element_type=jnp.float32,
                               precision=lax.Precision.HIGHEST)  # single unmasked, lane-dense store

    table_bytes = k_pad * d * 4
    tok_bytes = bs_pad * 4
    out_bytes = bs_pad * d * 4
    vmem_needed = (2 * table_bytes                     # table buffers (worst case)
                   + 2 * tile_rows * 4                 # token blocks (double-buffered)
                   + 2 * tile_rows * d * 4)            # output blocks (double-buffered)
    vmem_limit = min(max(2 * vmem_needed, 16 << 20), 64 << 20)   # fits v7x's 64 MiB VMEM

    out_flat = pl.pallas_call(
        kernel,
        out_shape=jax.ShapeDtypeStruct((bs_pad, d), jnp.float32),
        grid=grid,
        in_specs=[
            pl.BlockSpec((tile_rows, 1), lambda i: (i, 0)),   # tokens: advance with grid
            pl.BlockSpec((k_pad, d), lambda i: (0, 0)),       # table: fetched once, stays resident
        ],
        out_specs=pl.BlockSpec((tile_rows, d), lambda i: (i, 0)),  # full-D, lane-dense
        compiler_params=pltpu.CompilerParams(
            dimension_semantics=("parallel",),                # shards rows across v7x's 2 TCs
            vmem_limit_bytes=vmem_limit),
        cost_estimate=pl.CostEstimate(
            flops=2 * bs_pad * k_pad * d,
            transcendentals=0,
            bytes_accessed=table_bytes + tok_bytes + out_bytes),
    )(tok_col, table)

    return out_flat[:bs].reshape(b, s, d)


if __name__ == "__main__":
    key = jax.random.PRNGKey(0)
    k_wte, k_tok = jax.random.split(key)

    # Deterministic "pretrained" embedding table (nn.Embedding weight analogue).
    wte_weight = jax.random.normal(k_wte, (V, D), dtype=jnp.float32) * 0.02
    # initialize_from_vocab=True: learned embedding = first N_TOKENS rows of wte.
    learned_embedding = wte_weight[:N_TOKENS]

    # Input tokens [B, S]; the first N_TOKENS columns are placeholders (ignored by forward).
    tokens = jax.random.randint(k_tok, (B, S), 0, V, dtype=jnp.int32)

    out = soft_embedding_forward(tokens, wte_weight, learned_embedding)
    out = jax.block_until_ready(out)

    # Pure-JAX reference.
    ref_input = wte_weight[tokens[:, N_TOKENS:]]                        # [B, S-N, D]
    ref_learned = jnp.broadcast_to(learned_embedding, (B, N_TOKENS, D))
    ref = jnp.concatenate([ref_learned, ref_input], axis=1)             # [B, S, D]

    assert out.shape == (B, S, D)
    assert jnp.allclose(out, ref, atol=1e-6), "mismatch vs reference"
    print("KERNEL_OK")
</pallas_src>

<mosaic_0001>
module attributes {stable_mosaic.version = 11 : i64} {
  func.func @kernel(%arg0: i32, %arg1: memref<16x1xi32, #tpu.memory_space<vmem>>, %arg2: memref<128x128xf32, #tpu.memory_space<vmem>>, %arg3: memref<16x128xf32, #tpu.memory_space<vmem>>) attributes {dimension_semantics = [#tpu.dimension_semantics<parallel>], iteration_bounds = array<i64: 1>, scalar_prefetch = 0 : i64, scratch_operands = 0 : i64, tpu.core_type = #tpu.core_type<tc>, window_params = [{transform_indices = @transform_0, window_bounds = array<i64: 16, 1>}, {pipeline_mode = #tpu.pipeline_mode<synchronous>, transform_indices = @transform_1, window_bounds = array<i64: 128, 128>}, {transform_indices = @transform_2, window_bounds = array<i64: 16, 128>}]} {
    %c16_i32 = arith.constant 16 : i32
    %0 = arith.muli %arg0, %c16_i32 : i32
    %1 = tpu.iota {dimensions = array<i32: 0>} : vector<16x1xi32>
    %2 = vector.broadcast %0 : i32 to vector<16x1xi32>
    %3 = arith.addi %2, %1 : vector<16x1xi32>
    %c8_i32 = arith.constant 8 : i32
    %c0_i32 = arith.constant 0 : i32
    %4 = arith.cmpi eq, %c8_i32, %c0_i32 : i32
    %c1_i32 = arith.constant 1 : i32
    %5 = arith.select %4, %c1_i32, %c8_i32 : i32
    %6 = vector.broadcast %5 : i32 to vector<16x1xi32>
    %7 = arith.remsi %3, %6 : vector<16x1xi32>
    %c0_i32_0 = arith.constant 0 : i32
    %8 = vector.broadcast %c0_i32_0 : i32 to vector<16x1xi32>
    %9 = arith.cmpi ne, %7, %8 : vector<16x1xi32>
    %c0_i32_1 = arith.constant 0 : i32
    %10 = vector.broadcast %c0_i32_1 : i32 to vector<16x1xi32>
    %11 = arith.cmpi slt, %7, %10 : vector<16x1xi32>
    %c0_i32_2 = arith.constant 0 : i32
    %12 = arith.cmpi slt, %5, %c0_i32_2 : i32
    %13 = vector.broadcast %12 : i1 to vector<16x1xi1>
    %14 = vector.broadcast %13 : vector<16x1xi1> to vector<16x1xi1>
    %15 = arith.xori %11, %14 : vector<16x1xi1>
    %16 = arith.andi %15, %9 : vector<16x1xi1>
    %17 = vector.broadcast %5 : i32 to vector<16x1xi32>
    %18 = arith.addi %7, %17 : vector<16x1xi32>
    %19 = arith.select %16, %18, %7 : vector<16x1xi1>, vector<16x1xi32>
    %c4_i32 = arith.constant 4 : i32
    %20 = vector.broadcast %c4_i32 : i32 to vector<16x1xi32>
    %21 = arith.cmpi slt, %19, %20 : vector<16x1xi32>
    %c0 = arith.constant 0 : index
    %c0_3 = arith.constant 0 : index
    %22 = vector.load %arg1[%c0, %c0_3] : memref<16x1xi32, #tpu.memory_space<vmem>>, vector<16x1xi32>
    %c0_i32_4 = arith.constant 0 : i32
    %c63_i32 = arith.constant 63 : i32
    %23 = vector.broadcast %c0_i32_4 : i32 to vector<16x1xi32>
    %24 = arith.maxsi %23, %22 : vector<16x1xi32>
    %25 = vector.broadcast %c63_i32 : i32 to vector<16x1xi32>
    %26 = arith.minsi %25, %24 : vector<16x1xi32>
    %c4_i32_5 = arith.constant 4 : i32
    %27 = vector.broadcast %c4_i32_5 : i32 to vector<16x1xi32>
    %28 = arith.addi %27, %26 : vector<16x1xi32>
    %29 = arith.select %21, %19, %28 : vector<16x1xi1>, vector<16x1xi32>
    %30 = tpu.iota {dimensions = array<i32: 1>} : vector<16x128xi32>
    %31 = vector.broadcast %29 : vector<16x1xi32> to vector<16x128xi32>
    %32 = arith.cmpi eq, %30, %31 : vector<16x128xi32>
    %33 = arith.extui %32 : vector<16x128xi1> to vector<16x128xi32>
    %34 = arith.sitofp %33 : vector<16x128xi32> to vector<16x128xf32>
    %c0_6 = arith.constant 0 : index
    %c0_7 = arith.constant 0 : index
    %35 = vector.load %arg2[%c0_6, %c0_7] : memref<128x128xf32, #tpu.memory_space<vmem>>, vector<128x128xf32>
    %cst = arith.constant dense<0.000000e+00> : vector<16x128xf32>
    %36 = tpu.matmul %34, %35, %cst {dimension_numbers = #tpu.dot_dimension_numbers<[1], [0], [0], [1], [0, 0, 1, 1], [], []>, precision = #tpu.contract_precision<fp32>} : vector<16x128xf32>, vector<128x128xf32>, vector<16x128xf32> -> vector<16x128xf32>
    %c0_8 = arith.constant 0 : index
    %c0_9 = arith.constant 0 : index
    %37 = vector.load %arg3[%c0_8, %c0_9] : memref<16x128xf32, #tpu.memory_space<vmem>>, vector<16x128xf32>
    tpu.vector_store %arg3[%c0_8, %c0_9], %36 {strides = array<i32>} : memref<16x128xf32, #tpu.memory_space<vmem>>, vector<16x128xf32>,
    return
  }
  func.func @transform_0(%arg0: i32) -> (i32, i32) {
    %c0_i32 = arith.constant 0 : i32
    %c0_i32_0 = arith.constant 0 : i32
    return %arg0, %c0_i32 : i32, i32
  }
  func.func @transform_1(%arg0: i32) -> (i32, i32) {
    %c0_i32 = arith.constant 0 : i32
    %c0_i32_0 = arith.constant 0 : i32
    %c0_i32_1 = arith.constant 0 : i32
    return %c0_i32, %c0_i32_0 : i32, i32
  }
  func.func @transform_2(%arg0: i32) -> (i32, i32) {
    %c0_i32 = arith.constant 0 : i32
    %c0_i32_0 = arith.constant 0 : i32
    return %arg0, %c0_i32 : i32, i32
  }
}

</mosaic_0001>

<llo_original>
// kernel: tpu_custom_call.1
$region0: #{tpu_custom_call.1}
  #allocation0 [shape = 'u32[]', space=smem, size = 0x4, offset = 0x4, fixed_abs, tag = 'smem constant byte address 0x4 - core index']
  #allocation1 [shape = 'u32[72,128]{1,0:T(1,128)}', space=vmem, size = 0x9000, scoped, tag = 'internal scratch']
  %s0 = inlined_call_operand.vmem [shape: s32[16,1], index: 0, kind: input, shape index: {}]
  %s1 = inlined_call_operand.hbm [shape: f32[128,128], index: 1, kind: input, shape index: {}]
  %s2 = inlined_call_operand.hbm [shape: f32[16,128], index: 2, kind: output, shape index: {}]
  %s3 = sld [smem:[#allocation0]]
  $region22: #{tpu_custom_call.1} parent=0
    _
  %s5 = ssub.s32 1, %s3
  %s6 = scalar_select 0, %s5, %s3
  $region1: #{tpu_custom_call.1} parent=0
    #allocation2 [shape = 'u8[65536]{0}', space=vmem, size = 0x10000, scoped, tag = 'input window, operand 1, single buffered']
    #allocation3 [shape = 's32[1]{0}', space=sflag, size = 0x4, scoped, tag = 'scoped memory for tpu_custom_call.1']
    #allocation4 [shape = 's32[1]{0}', space=sflag, size = 0x4, scoped, tag = 'scoped memory for tpu_custom_call.1']
    #allocation5 [shape = 'u8[8192]{0}', space=vmem, size = 0x2000, scoped, tag = 'output window, operand 0, single buffered']
    %7 = vsyncpa [#allocation3], 0
    %8 = vsyncpa [#allocation4], 0
    // Predicated region
    $region2: #{tpu_custom_call.1} parent=1 // pred_check
      _
    $region3: #{tpu_custom_call.1} parent=1 // pred_check_branch
      %10 = sbr.rel (0) target = $region5
    $region4: #{tpu_custom_call.1} parent=1 // pred_region
      _
    $region5: #{tpu_custom_call.1} parent=1 // pred_fallthru
      _
    // Predicated region
    $region6: #{tpu_custom_call.1} parent=1 // pred_check
      _
    $region7: #{tpu_custom_call.1} parent=1 // pred_check_branch
      %12 = sbr.rel (0) target = $region9
    $region8: #{tpu_custom_call.1} parent=1 // pred_region
      %14 = vsyncadd [#allocation3], 0
      %s15 = sshll.u32 %s1, 4
      %s16 = int_to_ptr.hbm [resolvable:$true] %s15
      %s17 = sshll.u32 [#allocation2], 4
      %s18 = int_to_ptr.vmem [resolvable:$true] %s17
      %23 = dma.hbm_to_vmem [thread:$0]  %s16, 2048, %s18, [#allocation3], 128, 128, 8
    $region9: #{tpu_custom_call.1} parent=1 // pred_fallthru
      _
    // Predicated region
    $region10: #{tpu_custom_call.1} parent=1 // pred_check
      _
    $region11: #{tpu_custom_call.1} parent=1 // pred_check_branch
      %25 = sbr.rel (0) target = $region13
    $region12: #{tpu_custom_call.1} parent=1 // pred_region
      %27 = dma.done [#allocation3], 2048
    $region13: #{tpu_custom_call.1} parent=1 // pred_fallthru
      _
    %s28 = smul.u32 0, 16
    %v29 = vlaneseq
    %v30 = vshrl.u32 %v29, 7
    %v31 = vadd.s32 %v30, 8
    %v32 = vstv %s28
    %v33 = vadd.s32 %v32, %v30
    %v34 = vadd.s32 %v32, %v31
    %vm35 = vcmp.lt.s32.totalorder %v33, 0
    %v36 = vsub.s32 0, %v33
    %v37 = vsel %vm35, %v36, %v33
    %v38 = vshrl.u32 %v37, 3
    %v39 = vand.u32 %v37, 7
    %v40 = vsub.s32 0, %v39
    %v41 = vsel %vm35, %v40, %v39
    %vm42 = vcmp.lt.s32.totalorder %v34, 0
    %v43 = vsub.s32 0, %v34
    %v44 = vsel %vm42, %v43, %v34
    %v45 = vshrl.u32 %v44, 3
    %v46 = vand.u32 %v44, 7
    %v47 = vsub.s32 0, %v46
    %v48 = vsel %vm42, %v47, %v46
    %vm49 = vcmp.ne.s32.totalorder %v41, 0
    %vm50 = vcmp.ne.s32.totalorder %v48, 0
    %vm51 = vcmp.lt.s32.totalorder %v41, 0
    %vm52 = vcmp.lt.s32.totalorder %v48, 0
    %vm53 = vmand %vm51, %vm49
    %vm54 = vmand %vm52, %vm50
    %v55 = vadd.s32 %v41, 8
    %v56 = vadd.s32 %v48, 8
    %v57 = vsel %vm53, %v55, %v41
    %v58 = vsel %vm54, %v56, %v48
    %vm59 = vcmp.lt.s32.totalorder %v57, 4
    %vm60 = vcmp.lt.s32.totalorder %v58, 4
    %v61 = vld [vmem:[%s0] sm:$0xff]
    %v62 = vld [vmem:[%s0 + $0x8] sm:$0xff]
    %vm63 = vcmp.gt.s32.totalorder %v61, 0
    %v64 = vsel %vm63, %v61, 0
    %vm65 = vcmp.gt.s32.totalorder %v62, 0
    %v66 = vsel %vm65, %v62, 0
    %vm67 = vcmp.lt.s32.totalorder %v64, 63
    %v68 = vsel %vm67, %v64, 63
    %vm69 = vcmp.lt.s32.totalorder %v66, 63
    %v70 = vsel %vm69, %v66, 63
    %v71 = vadd.s32 %v68, 4
    %v72 = vadd.s32 %v70, 4
    %v73 = vsel %vm59, %v57, %v71
    %v74 = vsel %vm60, %v58, %v72
    %v75 = vlaneseq
    %v76 = vand.u32 %v75, 127
    %77 = vset.pattern.permute.xlu0 0
    %78 = vperm.xlu0 %77, %v73
    %v79 = vpop.permute.xlu0 %78
    %80 = vset.pattern.permute.xlu0 0
    %81 = vperm.xlu0 %80, %v74
    %v82 = vpop.permute.xlu0 %81
    %vm83 = vcmp.eq.s32.totalorder %v76, %v79
    %vm84 = vcmp.eq.s32.totalorder %v76, %v82
    %v85 = vsel %vm83, 1, 0
    %v86 = vsel %vm84, 1, 0
    %v87 = vcvt.s32.f32 %v85
    %v88 = vcvt.s32.f32 %v86
    %v89 = vld [vmem:[#allocation2] sm:$0xff]
    %v90 = vld [vmem:[#allocation2 + $0x8] sm:$0xff]
    %v91 = vld [vmem:[#allocation2 + $0x10] sm:$0xff]
    %v92 = vld [vmem:[#allocation2 + $0x18] sm:$0xff]
    %v93 = vld [vmem:[#allocation2 + $0x20] sm:$0xff]
    %v94 = vld [vmem:[#allocation2 + $0x28] sm:$0xff]
    %v95 = vld [vmem:[#allocation2 + $0x30] sm:$0xff]
    %v96 = vld [vmem:[#allocation2 + $0x38] sm:$0xff]
    %v97 = vld [vmem:[#allocation2 + $0x40] sm:$0xff]
    %v98 = vld [vmem:[#allocation2 + $0x48] sm:$0xff]
    %v99 = vld [vmem:[#allocation2 + $0x50] sm:$0xff]
    %v100 = vld [vmem:[#allocation2 + $0x58] sm:$0xff]
    %v101 = vld [vmem:[#allocation2 + $0x60] sm:$0xff]
    %v102 = vld [vmem:[#allocation2 + $0x68] sm:$0xff]
    %v103 = vld [vmem:[#allocation2 + $0x70] sm:$0xff]
    %v104 = vld [vmem:[#allocation2 + $0x78] sm:$0xff]
    %v105 = vand.u32 %v104, 4294901760
    %106 = vmatpush.msra.mxu0 %v105
    %v107 = vand.u32 %v103, 4294901760
    %108 = vmatpush.msra.mxu0 %v107
    %v109 = vand.u32 %v102, 4294901760
    %110 = vmatpush.msra.mxu0 %v109
    %v111 = vand.u32 %v101, 4294901760
    %112 = vmatpush.msra.mxu0 %v111
    %v113 = vand.u32 %v100, 4294901760
    %114 = vmatpush.msra.mxu0 %v113
    %v115 = vand.u32 %v99, 4294901760
    %116 = vmatpush.msra.mxu0 %v115
    %v117 = vand.u32 %v98, 4294901760
    %118 = vmatpush.msra.mxu0 %v117
    %v119 = vand.u32 %v97, 4294901760
    %120 = vmatpush.msra.mxu0 %v119
    %v121 = vand.u32 %v96, 4294901760
    %122 = vmatpush.msra.mxu0 %v121
    %v123 = vand.u32 %v95, 4294901760
    %124 = vmatpush.msra.mxu0 %v123
    %v125 = vand.u32 %v94, 4294901760
    %126 = vmatpush.msra.mxu0 %v125
    %v127 = vand.u32 %v93, 4294901760
    %128 = vmatpush.msra.mxu0 %v127
    %v129 = vand.u32 %v92, 4294901760
    %130 = vmatpush.msra.mxu0 %v129
    %v131 = vand.u32 %v91, 4294901760
    %132 = vmatpush.msra.mxu0 %v131
    %v133 = vand.u32 %v90, 4294901760
    %134 = vmatpush.msra.mxu0 %v133
    %v135 = vand.u32 %v89, 4294901760
    %136 = vmatpush.msra.mxu0 %v135
    %v137 = vand.u32 %v87, 4294901760
    %v138 = vsub.f32 %v87, %v137
    %v139 = vand.u32 %v138, 4294901760
    %v140 = vsub.f32 %v138, %v139
    %v141 = vand.u32 %v140, 4294901760
    %142 = vmatmul.f32.gmra.mxu0 %v141
    %v143 = vpop.f32.mrf.mxu0
    %v144 = vadd.f32 0.0, %v143
    %v145 = vand.u32 %v88, 4294901760
    %v146 = vsub.f32 %v88, %v145
    %v147 = vand.u32 %v146, 4294901760
    %v148 = vsub.f32 %v146, %v147
    %v149 = vand.u32 %v148, 4294901760
    %150 = vmatmul.f32.gmra.mxu0 %v149
    %v151 = vpop.f32.mrf.mxu0
    %v152 = vadd.f32 0.0, %v151
    %153 = vdwg.mxu0
    %v154 = vand.u32 %v104, 4294901760
    %v155 = vsub.f32 %v104, %v154
    %v156 = vand.u32 %v155, 4294901760
    %v157 = vsub.f32 %v155, %v156
    %v158 = vand.u32 %v157, 4294901760
    %159 = vmatpush.msra.mxu0 %v158
    %v160 = vand.u32 %v103, 4294901760
    %v161 = vsub.f32 %v103, %v160
    %v162 = vand.u32 %v161, 4294901760
    %v163 = vsub.f32 %v161, %v162
    %v164 = vand.u32 %v163, 4294901760
    %165 = vmatpush.msra.mxu0 %v164
    %v166 = vand.u32 %v102, 4294901760
    %v167 = vsub.f32 %v102, %v166
    %v168 = vand.u32 %v167, 4294901760
    %v169 = vsub.f32 %v167, %v168
    %v170 = vand.u32 %v169, 4294901760
    %171 = vmatpush.msra.mxu0 %v170
    %v172 = vand.u32 %v101, 4294901760
    %v173 = vsub.f32 %v101, %v172
    %v174 = vand.u32 %v173, 4294901760
    %v175 = vsub.f32 %v173, %v174
    %v176 = vand.u32 %v175, 4294901760
    %177 = vmatpush.msra.mxu0 %v176
    %v178 = vand.u32 %v100, 4294901760
    %v179 = vsub.f32 %v100, %v178
    %v180 = vand.u32 %v179, 4294901760
    %v181 = vsub.f32 %v179, %v180
    %v182 = vand.u32 %v181, 4294901760
    %183 = vmatpush.msra.mxu0 %v182
    %v184 = vand.u32 %v99, 4294901760
    %v185 = vsub.f32 %v99, %v184
    %v186 = vand.u32 %v185, 4294901760
    %v187 = vsub.f32 %v185, %v186
    %v188 = vand.u32 %v187, 4294901760
    %189 = vmatpush.msra.mxu0 %v188
    %v190 = vand.u32 %v98, 4294901760
    %v191 = vsub.f32 %v98, %v190
    %v192 = vand.u32 %v191, 4294901760
    %v193 = vsub.f32 %v191, %v192
    %v194 = vand.u32 %v193, 4294901760
    %195 = vmatpush.msra.mxu0 %v194
    %v196 = vand.u32 %v97, 4294901760
    %v197 = vsub.f32 %v97, %v196
    %v198 = vand.u32 %v197, 4294901760
    %v199 = vsub.f32 %v197, %v198
    %v200 = vand.u32 %v199, 4294901760
    %201 = vmatpush.msra.mxu0 %v200
    %v202 = vand.u32 %v96, 4294901760
    %v203 = vsub.f32 %v96, %v202
    %v204 = vand.u32 %v203, 4294901760
    %v205 = vsub.f32 %v203, %v204
    %v206 = vand.u32 %v205, 4294901760
    %207 = vmatpush.msra.mxu0 %v206
    %v208 = vand.u32 %v95, 4294901760
    %v209 = vsub.f32 %v95, %v208
    %v210 = vand.u32 %v209, 4294901760
    %v211 = vsub.f32 %v209, %v210
    %v212 = vand.u32 %v211, 4294901760
    %213 = vmatpush.msra.mxu0 %v212
    %v214 = vand.u32 %v94, 4294901760
    %v215 = vsub.f32 %v94, %v214
    %v216 = vand.u32 %v215, 4294901760
    %v217 = vsub.f32 %v215, %v216
    %v218 = vand.u32 %v217, 4294901760
    %219 = vmatpush.msra.mxu0 %v218
    %v220 = vand.u32 %v93, 4294901760
    %v221 = vsub.f32 %v93, %v220
    %v222 = vand.u32 %v221, 4294901760
    %v223 = vsub.f32 %v221, %v222
    %v224 = vand.u32 %v223, 4294901760
    %225 = vmatpush.msra.mxu0 %v224
    %v226 = vand.u32 %v92, 4294901760
    %v227 = vsub.f32 %v92, %v226
    %v228 = vand.u32 %v227, 4294901760
    %v229 = vsub.f32 %v227, %v228
    %v230 = vand.u32 %v229, 4294901760
    %231 = vmatpush.msra.mxu0 %v230
    %v232 = vand.u32 %v91, 4294901760
    %v233 = vsub.f32 %v91, %v232
    %v234 = vand.u32 %v233, 4294901760
    %v235 = vsub.f32 %v233, %v234
    %v236 = vand.u32 %v235, 4294901760
    %237 = vmatpush.msra.mxu0 %v236
    %v238 = vand.u32 %v90, 4294901760
    %v239 = vsub.f32 %v90, %v238
    %v240 = vand.u32 %v239, 4294901760
    %v241 = vsub.f32 %v239, %v240
    %v242 = vand.u32 %v241, 4294901760
    %243 = vmatpush.msra.mxu0 %v242
    %v244 = vand.u32 %v89, 4294901760
    %v245 = vsub.f32 %v89, %v244
    %v246 = vand.u32 %v245, 4294901760
    %v247 = vsub.f32 %v245, %v246
    %v248 = vand.u32 %v247, 4294901760
    %249 = vmatpush.msra.mxu0 %v248
    %v250 = vand.u32 %v87, 4294901760
    %251 = vmatmul.f32.gmra.mxu0 %v250
    %v252 = vpop.f32.mrf.mxu0
    %v253 = vadd.f32 %v144, %v252
    %v254 = vand.u32 %v88, 4294901760
    %255 = vmatmul.f32.gmra.mxu0 %v254
    %v256 = vpop.f32.mrf.mxu0
    %v257 = vadd.f32 %v152, %v256
    %258 = vdwg.mxu0
    %v259 = vand.u32 %v104, 4294901760
    %v260 = vsub.f32 %v104, %v259
    %261 = vmatpush.msra.mxu0 %v260
    %v262 = vand.u32 %v103, 4294901760
    %v263 = vsub.f32 %v103, %v262
    %264 = vmatpush.msra.mxu0 %v263
    %v265 = vand.u32 %v102, 4294901760
    %v266 = vsub.f32 %v102, %v265
    %267 = vmatpush.msra.mxu0 %v266
    %v268 = vand.u32 %v101, 4294901760
    %v269 = vsub.f32 %v101, %v268
    %270 = vmatpush.msra.mxu0 %v269
    %v271 = vand.u32 %v100, 4294901760
    %v272 = vsub.f32 %v100, %v271
    %273 = vmatpush.msra.mxu0 %v272
    %v274 = vand.u32 %v99, 4294901760
    %v275 = vsub.f32 %v99, %v274
    %276 = vmatpush.msra.mxu0 %v275
    %v277 = vand.u32 %v98, 4294901760
    %v278 = vsub.f32 %v98, %v277
    %279 = vmatpush.msra.mxu0 %v278
    %v280 = vand.u32 %v97, 4294901760
    %v281 = vsub.f32 %v97, %v280
    %282 = vmatpush.msra.mxu0 %v281
    %v283 = vand.u32 %v96, 4294901760
    %v284 = vsub.f32 %v96, %v283
    %285 = vmatpush.msra.mxu0 %v284
    %v286 = vand.u32 %v95, 4294901760
    %v287 = vsub.f32 %v95, %v286
    %288 = vmatpush.msra.mxu0 %v287
    %v289 = vand.u32 %v94, 4294901760
    %v290 = vsub.f32 %v94, %v289
    %291 = vmatpush.msra.mxu0 %v290
    %v292 = vand.u32 %v93, 4294901760
    %v293 = vsub.f32 %v93, %v292
    %294 = vmatpush.msra.mxu0 %v293
    %v295 = vand.u32 %v92, 4294901760
    %v296 = vsub.f32 %v92, %v295
    %297 = vmatpush.msra.mxu0 %v296
    %v298 = vand.u32 %v91, 4294901760
    %v299 = vsub.f32 %v91, %v298
    %300 = vmatpush.msra.mxu0 %v299
    %v301 = vand.u32 %v90, 4294901760
    %v302 = vsub.f32 %v90, %v301
    %303 = vmatpush.msra.mxu0 %v302
    %v304 = vand.u32 %v89, 4294901760
    %v305 = vsub.f32 %v89, %v304
    %306 = vmatpush.msra.mxu0 %v305
    %v307 = vand.u32 %v87, 4294901760
    %v308 = vsub.f32 %v87, %v307
    %309 = vmatmul.f32.gmra.mxu0 %v308
    %v310 = vpop.f32.mrf.mxu0
    %v311 = vadd.f32 %v253, %v310
    %v312 = vand.u32 %v88, 4294901760
    %v313 = vsub.f32 %v88, %v312
    %314 = vmatmul.f32.gmra.mxu0 %v313
    %v315 = vpop.f32.mrf.mxu0
    %v316 = vadd.f32 %v257, %v315
    %317 = vdwg.mxu0
    %v318 = vand.u32 %v104, 4294901760
    %319 = vmatpush.msra.mxu0 %v318
    %v320 = vand.u32 %v103, 4294901760
    %321 = vmatpush.msra.mxu0 %v320
    %v322 = vand.u32 %v102, 4294901760
    %323 = vmatpush.msra.mxu0 %v322
    %v324 = vand.u32 %v101, 4294901760
    %325 = vmatpush.msra.mxu0 %v324
    %v326 = vand.u32 %v100, 4294901760
    %327 = vmatpush.msra.mxu0 %v326
    %v328 = vand.u32 %v99, 4294901760
    %329 = vmatpush.msra.mxu0 %v328
    %v330 = vand.u32 %v98, 4294901760
    %331 = vmatpush.msra.mxu0 %v330
    %v332 = vand.u32 %v97, 4294901760
    %333 = vmatpush.msra.mxu0 %v332
    %v334 = vand.u32 %v96, 4294901760
    %335 = vmatpush.msra.mxu0 %v334
    %v336 = vand.u32 %v95, 4294901760
    %337 = vmatpush.msra.mxu0 %v336
    %v338 = vand.u32 %v94, 4294901760
    %339 = vmatpush.msra.mxu0 %v338
    %v340 = vand.u32 %v93, 4294901760
    %341 = vmatpush.msra.mxu0 %v340
    %v342 = vand.u32 %v92, 4294901760
    %343 = vmatpush.msra.mxu0 %v342
    %v344 = vand.u32 %v91, 4294901760
    %345 = vmatpush.msra.mxu0 %v344
    %v346 = vand.u32 %v90, 4294901760
    %347 = vmatpush.msra.mxu0 %v346
    %v348 = vand.u32 %v89, 4294901760
    %349 = vmatpush.msra.mxu0 %v348
    %v350 = vand.u32 %v87, 4294901760
    %v351 = vsub.f32 %v87, %v350
    %v352 = vand.u32 %v351, 4294901760
    %353 = vmatmul.f32.gmra.mxu0 %v352
    %v354 = vpop.f32.mrf.mxu0
    %v355 = vadd.f32 %v311, %v354
    %v356 = vand.u32 %v88, 4294901760
    %v357 = vsub.f32 %v88, %v356
    %v358 = vand.u32 %v357, 4294901760
    %359 = vmatmul.f32.gmra.mxu0 %v358
    %v360 = vpop.f32.mrf.mxu0
    %v361 = vadd.f32 %v316, %v360
    %362 = vdwg.mxu0
    %v363 = vand.u32 %v104, 4294901760
    %v364 = vsub.f32 %v104, %v363
    %v365 = vand.u32 %v364, 4294901760
    %366 = vmatpush.msra.mxu0 %v365
    %v367 = vand.u32 %v103, 4294901760
    %v368 = vsub.f32 %v103, %v367
    %v369 = vand.u32 %v368, 4294901760
    %370 = vmatpush.msra.mxu0 %v369
    %v371 = vand.u32 %v102, 4294901760
    %v372 = vsub.f32 %v102, %v371
    %v373 = vand.u32 %v372, 4294901760
    %374 = vmatpush.msra.mxu0 %v373
    %v375 = vand.u32 %v101, 4294901760
    %v376 = vsub.f32 %v101, %v375
    %v377 = vand.u32 %v376, 4294901760
    %378 = vmatpush.msra.mxu0 %v377
    %v379 = vand.u32 %v100, 4294901760
    %v380 = vsub.f32 %v100, %v379
    %v381 = vand.u32 %v380, 4294901760
    %382 = vmatpush.msra.mxu0 %v381
    %v383 = vand.u32 %v99, 4294901760
    %v384 = vsub.f32 %v99, %v383
    %v385 = vand.u32 %v384, 4294901760
    %386 = vmatpush.msra.mxu0 %v385
    %v387 = vand.u32 %v98, 4294901760
    %v388 = vsub.f32 %v98, %v387
    %v389 = vand.u32 %v388, 4294901760
    %390 = vmatpush.msra.mxu0 %v389
    %v391 = vand.u32 %v97, 4294901760
    %v392 = vsub.f32 %v97, %v391
    %v393 = vand.u32 %v392, 4294901760
    %394 = vmatpush.msra.mxu0 %v393
    %v395 = vand.u32 %v96, 4294901760
    %v396 = vsub.f32 %v96, %v395
    %v397 = vand.u32 %v396, 4294901760
    %398 = vmatpush.msra.mxu0 %v397
    %v399 = vand.u32 %v95, 4294901760
    %v400 = vsub.f32 %v95, %v399
    %v401 = vand.u32 %v400, 4294901760
    %402 = vmatpush.msra.mxu0 %v401
    %v403 = vand.u32 %v94, 4294901760
    %v404 = vsub.f32 %v94, %v403
    %v405 = vand.u32 %v404, 4294901760
    %406 = vmatpush.msra.mxu0 %v405
    %v407 = vand.u32 %v93, 4294901760
    %v408 = vsub.f32 %v93, %v407
    %v409 = vand.u32 %v408, 4294901760
    %410 = vmatpush.msra.mxu0 %v409
    %v411 = vand.u32 %v92, 4294901760
    %v412 = vsub.f32 %v92, %v411
    %v413 = vand.u32 %v412, 4294901760
    %414 = vmatpush.msra.mxu0 %v413
    %v415 = vand.u32 %v91, 4294901760
    %v416 = vsub.f32 %v91, %v415
    %v417 = vand.u32 %v416, 4294901760
    %418 = vmatpush.msra.mxu0 %v417
    %v419 = vand.u32 %v90, 4294901760
    %v420 = vsub.f32 %v90, %v419
    %v421 = vand.u32 %v420, 4294901760
    %422 = vmatpush.msra.mxu0 %v421
    %v423 = vand.u32 %v89, 4294901760
    %v424 = vsub.f32 %v89, %v423
    %v425 = vand.u32 %v424, 4294901760
    %426 = vmatpush.msra.mxu0 %v425
    %v427 = vand.u32 %v87, 4294901760
    %428 = vmatmul.f32.gmra.mxu0 %v427
    %v429 = vpop.f32.mrf.mxu0
    %v430 = vadd.f32 %v355, %v429
    %v431 = vand.u32 %v88, 4294901760
    %432 = vmatmul.f32.gmra.mxu0 %v431
    %v433 = vpop.f32.mrf.mxu0
    %v434 = vadd.f32 %v361, %v433
    %435 = vdwg.mxu0
    %v436 = vand.u32 %v104, 4294901760
    %437 = vmatpush.msra.mxu0 %v436
    %v438 = vand.u32 %v103, 4294901760
    %439 = vmatpush.msra.mxu0 %v438
    %v440 = vand.u32 %v102, 4294901760
    %441 = vmatpush.msra.mxu0 %v440
    %v442 = vand.u32 %v101, 4294901760
    %443 = vmatpush.msra.mxu0 %v442
    %v444 = vand.u32 %v100, 4294901760
    %445 = vmatpush.msra.mxu0 %v444
    %v446 = vand.u32 %v99, 4294901760
    %447 = vmatpush.msra.mxu0 %v446
    %v448 = vand.u32 %v98, 4294901760
    %449 = vmatpush.msra.mxu0 %v448
    %v450 = vand.u32 %v97, 4294901760
    %451 = vmatpush.msra.mxu0 %v450
    %v452 = vand.u32 %v96, 4294901760
    %453 = vmatpush.msra.mxu0 %v452
    %v454 = vand.u32 %v95, 4294901760
    %455 = vmatpush.msra.mxu0 %v454
    %v456 = vand.u32 %v94, 4294901760
    %457 = vmatpush.msra.mxu0 %v456
    %v458 = vand.u32 %v93, 4294901760
    %459 = vmatpush.msra.mxu0 %v458
    %v460 = vand.u32 %v92, 4294901760
    %461 = vmatpush.msra.mxu0 %v460
    %v462 = vand.u32 %v91, 4294901760
    %463 = vmatpush.msra.mxu0 %v462
    %v464 = vand.u32 %v90, 4294901760
    %465 = vmatpush.msra.mxu0 %v464
    %v466 = vand.u32 %v89, 4294901760
    %467 = vmatpush.msra.mxu0 %v466
    %v468 = vand.u32 %v87, 4294901760
    %469 = vmatmul.f32.gmra.mxu0 %v468
    %v470 = vpop.f32.mrf.mxu0
    %v471 = vadd.f32 %v430, %v470
    %v472 = vand.u32 %v88, 4294901760
    %473 = vmatmul.f32.gmra.mxu0 %v472
    %v474 = vpop.f32.mrf.mxu0
    %v475 = vadd.f32 %v434, %v474
    %476 = vdwg.mxu0
    %477 = vst [vmem:[#allocation5] sm:$0xff] %v471
    %478 = vst [vmem:[#allocation5 + $0x8] sm:$0xff] %v475
    // Predicated region
    $region14: #{tpu_custom_call.1} parent=1 // pred_check
      _
    $region15: #{tpu_custom_call.1} parent=1 // pred_check_branch
      %480 = sbr.rel (0) target = $region17
    $region16: #{tpu_custom_call.1} parent=1 // pred_region
      %482 = vsyncadd [#allocation4], 0
      %s483 = sshll.u32 [#allocation5], 4
      %s484 = int_to_ptr.vmem [resolvable:$true] %s483
      %s485 = sshll.u32 %s2, 4
      %s486 = int_to_ptr.hbm [resolvable:$true] %s485
      %491 = dma.vmem_to_hbm [thread:$0]  %s484, 256, %s486, [#allocation4], 128, 128, 8
    $region17: #{tpu_custom_call.1} parent=1 // pred_fallthru
      _
    // Predicated region
    $region18: #{tpu_custom_call.1} parent=1 // pred_check
      _
    $region19: #{tpu_custom_call.1} parent=1 // pred_check_branch
      %493 = sbr.rel (0) target = $region21
    $region20: #{tpu_custom_call.1} parent=1 // pred_region
      %495 = dma.done [#allocation4], 256
    $region21: #{tpu_custom_call.1} parent=1 // pred_fallthru
      _
    %496 = vsyncpa [#allocation3], 1
    %497 = vsyncpa [#allocation4], 1

</llo_original>
